<compile_context>
chip_gen: v6e
topology: v6e:2x2x1
jax: 0.10.0
libtpu: 0.0.40
codegen_flags: <defaults>
</compile_context>

<pallas_src>
import functools

import jax
import jax.numpy as jnp
from jax.experimental import pallas as pl
from jax.experimental.pallas import tpu as pltpu


def _pow_int(x, n: int):
    # x ** n for small static positive integer n via repeated VPU multiplies.
    acc = x
    for _ in range(n - 1):
        acc = acc * x
    return acc


def _fold_reduce(part, s_fold: int, w_out: int):
    # part: (BC, S*W) partial sums; sum the S contiguous W-wide lane chunks.
    if s_fold == 1:
        return part
    acc = part[:, 0:w_out]
    for s in range(1, s_fold):
        acc = acc + part[:, s * w_out:(s + 1) * w_out]
    return acc


def _compute_dtype(dt):
    return dt if dt in (jnp.float32, jnp.bfloat16) else jnp.float32


def _gem_kernel_static(x_ref, o_ref, *, eps, inv_hw, p_int, inv_p, s_fold, w_out):
    # x_ref: (BC, H//S, S*W) VMEM tile; o_ref: (BC, W) VMEM tile.
    cdt = _compute_dtype(x_ref.dtype)
    x = x_ref[...].astype(cdt)
    xc = jnp.maximum(x, jnp.asarray(eps, cdt))        # clamp(min=eps) > 0
    xp = _pow_int(xc, p_int)                          # VPU-only pow (no EUP in hot path)
    part = jnp.sum(xp.astype(jnp.float32), axis=1)    # f32 accumulate over H//S
    pooled = _fold_reduce(part, s_fold, w_out) * inv_hw
    # final (.)**(1/p) only on the tiny reduced (BC, W) slab
    out = jnp.exp(jnp.log(pooled) * inv_p)
    o_ref[...] = out.astype(o_ref.dtype)


def _gem_kernel_dynamic(p_ref, x_ref, o_ref, *, eps, inv_hw, s_fold, w_out):
    # Generic traced-p path: p lives in SMEM, pow via exp/log (xc > 0).
    p = p_ref[0]
    cdt = _compute_dtype(x_ref.dtype)
    x = x_ref[...].astype(cdt)
    xc = jnp.maximum(x, jnp.asarray(eps, cdt))
    xp = jnp.exp(p.astype(cdt) * jnp.log(xc))
    part = jnp.sum(xp.astype(jnp.float32), axis=1)
    pooled = _fold_reduce(part, s_fold, w_out) * inv_hw
    out = jnp.exp(jnp.log(pooled) / p)
    o_ref[...] = out.astype(o_ref.dtype)


def _choose_fold(h, w):
    """Largest S dividing H with S*W <= 128 (lane-density fold, pure reshape)."""
    if w >= 128:
        return 1
    best = 1
    for s in range(1, min(h, 128 // w) + 1):
        if h % s == 0:
            best = s
    return best


def _choose_bc(nc, row_bytes, target_bytes=4 * 1024 * 1024):
    """Rows (fused N*C) per grid step: ~4 MiB input tiles, sublane-aligned."""
    bc = max(1, target_bytes // max(row_bytes, 1))
    if bc >= nc:
        return nc
    bc = max(8, (bc // 8) * 8)     # output block sublane dim must be a multiple of 8
    return min(bc, nc)


def pnt_gem(x, p, *, eps=1e-6, kernel=None):
    """x: (N, C, H, W); p: shape-(1,) parameter (or python float).

    kernel defaults to (H, 1), mirroring the module's full-height pooling.
    """
    N, C, H, W = x.shape
    if kernel is None:
        kernel = (H, 1)
    kh, kw = kernel
    assert kh == H and kw == 1, "This kernel implements the default full-height (H, 1) GeM pooling"
    # TODO(synk): general avg_pool2d kernel sizes other than (H, 1) are not implemented.

    NC = N * C
    S = _choose_fold(H, W)          # fold S point-slices into the lane axis
    Hs = H // S
    L = S * W
    xf = x.reshape(NC, Hs, L)       # pure contiguous reshape (no transpose)

    row_bytes = H * W * x.dtype.itemsize
    BC = _choose_bc(NC, row_bytes)
    grid = (pl.cdiv(NC, BC),)

    # Static-p fast path when p is concrete and a small integer (default p=3).
    p_static = None
    try:
        pv = float(jnp.asarray(p).reshape(-1)[0])
        if abs(pv - round(pv)) < 1e-6 and 1 <= int(round(pv)) <= 8:
            p_static = int(round(pv))
    except Exception:
        p_static = None

    common = dict(eps=float(eps), inv_hw=1.0 / float(kh * kw), s_fold=S, w_out=W)
    out_shape = jax.ShapeDtypeStruct((NC, W), x.dtype)
    x_spec = pl.BlockSpec((BC, Hs, L), lambda i: (i, 0, 0))
    o_spec = pl.BlockSpec((BC, W), lambda i: (i, 0))
    cparams = pltpu.CompilerParams(
        dimension_semantics=("parallel",),
        vmem_limit_bytes=32 * 1024 * 1024,
    )

    if p_static is not None:
        kern = functools.partial(
            _gem_kernel_static, p_int=p_static, inv_p=1.0 / float(p_static), **common)
        out = pl.pallas_call(
            kern,
            out_shape=out_shape,
            grid=grid,
            in_specs=[x_spec],
            out_specs=o_spec,
            compiler_params=cparams,
        )(xf)
    else:
        kern = functools.partial(_gem_kernel_dynamic, **common)
        p_arr = jnp.asarray(p, dtype=jnp.float32).reshape(1)
        out = pl.pallas_call(
            kern,
            out_shape=out_shape,
            grid=grid,
            in_specs=[pl.BlockSpec(memory_space=pltpu.SMEM), x_spec],
            out_specs=o_spec,
            compiler_params=cparams,
        )(p_arr, xf)

    return out.reshape(N, C, H // kh, W // kw)


def _reference_gem(x, p, eps=1e-6):
    # Pure-JAX reference of F.avg_pool2d(x.clamp(eps)**p, (H,1))**(1/p)
    pv = jnp.asarray(p, dtype=jnp.float32).reshape(-1)[0]
    xc = jnp.maximum(x, eps) ** pv
    pooled = jnp.mean(xc, axis=2, keepdims=True)
    return pooled ** (1.0 / pv)


if __name__ == "__main__":
    key = jax.random.PRNGKey(0)
    N, C, H, W = 2, 4, 16, 16
    x = jax.random.normal(key, (N, C, H, W), dtype=jnp.float32)

    # Deterministic parameter init, matching nn.Parameter(torch.ones(1) * 3)
    p = jnp.ones((1,), dtype=jnp.float32) * 3.0
    y = jax.block_until_ready(pnt_gem(x, p, eps=1e-6, kernel=(H, 1)))
    y_ref = _reference_gem(x, p, eps=1e-6)
    assert y.shape == (N, C, 1, W), y.shape
    assert jnp.allclose(y, y_ref, rtol=1e-4, atol=1e-5), (
        float(jnp.max(jnp.abs(y - y_ref)))
    )

    # Non-integer p exercises the traced-parameter (SMEM scalar, exp/log) path.
    p2 = jnp.ones((1,), dtype=jnp.float32) * 2.5
    y2 = jax.block_until_ready(pnt_gem(x, p2, eps=1e-6, kernel=(H, 1)))
    y2_ref = _reference_gem(x, p2, eps=1e-6)
    assert y2.shape == (N, C, 1, W), y2.shape
    assert jnp.allclose(y2, y2_ref, rtol=1e-4, atol=1e-5), (
        float(jnp.max(jnp.abs(y2 - y2_ref)))
    )

    print("KERNEL_OK")
</pallas_src>

<mosaic_0001>
module attributes {stable_mosaic.version = 11 : i64} {
  func.func @_gem_kernel_static(%arg0: i32, %arg1: memref<8x2x128xf32, #tpu.memory_space<vmem>>, %arg2: memref<8x16xf32, #tpu.memory_space<vmem>>) attributes {dimension_semantics = [#tpu.dimension_semantics<parallel>], iteration_bounds = array<i64: 1>, scalar_prefetch = 0 : i64, scratch_operands = 0 : i64, tpu.core_type = #tpu.core_type<tc>, window_params = [{transform_indices = @transform_0, window_bounds = array<i64: 8, 2, 128>}, {transform_indices = @transform_1, window_bounds = array<i64: 8, 16>}]} {
    %c0 = arith.constant 0 : index
    %c0_0 = arith.constant 0 : index
    %c0_1 = arith.constant 0 : index
    %0 = vector.load %arg1[%c0, %c0_0, %c0_1] : memref<8x2x128xf32, #tpu.memory_space<vmem>>, vector<8x2x128xf32>
    %cst = arith.constant 9.99999997E-7 : f32
    %1 = vector.broadcast %cst : f32 to vector<8x2x128xf32>
    %2 = arith.maximumf %0, %1 : vector<8x2x128xf32>
    %3 = arith.mulf %2, %2 : vector<8x2x128xf32>
    %4 = arith.mulf %3, %2 : vector<8x2x128xf32>
    %cst_2 = arith.constant dense<0.000000e+00> : vector<8x128xf32>
    %5 = vector.multi_reduction <add>, %4, %cst_2 [1] : vector<8x2x128xf32> to vector<8x128xf32>
    %6 = vector.extract_strided_slice %5 {offsets = [0, 0], sizes = [8, 16], strides = [1, 1]} : vector<8x128xf32> to vector<8x16xf32>
    %7 = vector.extract_strided_slice %5 {offsets = [0, 16], sizes = [8, 16], strides = [1, 1]} : vector<8x128xf32> to vector<8x16xf32>
    %8 = arith.addf %6, %7 : vector<8x16xf32>
    %9 = vector.extract_strided_slice %5 {offsets = [0, 32], sizes = [8, 16], strides = [1, 1]} : vector<8x128xf32> to vector<8x16xf32>
    %10 = arith.addf %8, %9 : vector<8x16xf32>
    %11 = vector.extract_strided_slice %5 {offsets = [0, 48], sizes = [8, 16], strides = [1, 1]} : vector<8x128xf32> to vector<8x16xf32>
    %12 = arith.addf %10, %11 : vector<8x16xf32>
    %13 = vector.extract_strided_slice %5 {offsets = [0, 64], sizes = [8, 16], strides = [1, 1]} : vector<8x128xf32> to vector<8x16xf32>
    %14 = arith.addf %12, %13 : vector<8x16xf32>
    %15 = vector.extract_strided_slice %5 {offsets = [0, 80], sizes = [8, 16], strides = [1, 1]} : vector<8x128xf32> to vector<8x16xf32>
    %16 = arith.addf %14, %15 : vector<8x16xf32>
    %17 = vector.extract_strided_slice %5 {offsets = [0, 96], sizes = [8, 16], strides = [1, 1]} : vector<8x128xf32> to vector<8x16xf32>
    %18 = arith.addf %16, %17 : vector<8x16xf32>
    %19 = vector.extract_strided_slice %5 {offsets = [0, 112], sizes = [8, 16], strides = [1, 1]} : vector<8x128xf32> to vector<8x16xf32>
    %20 = arith.addf %18, %19 : vector<8x16xf32>
    %cst_3 = arith.constant 6.250000e-02 : f32
    %21 = vector.broadcast %cst_3 : f32 to vector<8x16xf32>
    %22 = arith.mulf %20, %21 : vector<8x16xf32>
    %23 = math.log %22 : vector<8x16xf32>
    %cst_4 = arith.constant 0.333333343 : f32
    %24 = vector.broadcast %cst_4 : f32 to vector<8x16xf32>
    %25 = arith.mulf %23, %24 : vector<8x16xf32>
    %26 = math.exp %25 : vector<8x16xf32>
    %c0_5 = arith.constant 0 : index
    %c0_6 = arith.constant 0 : index
    %27 = vector.load %arg2[%c0_5, %c0_6] : memref<8x16xf32, #tpu.memory_space<vmem>>, vector<8x16xf32>
    tpu.vector_store %arg2[%c0_5, %c0_6], %26 {strides = array<i32>} : memref<8x16xf32, #tpu.memory_space<vmem>>, vector<8x16xf32>,
    return
  }
  func.func @transform_0(%arg0: i32) -> (i32, i32, i32) {
    %c0_i32 = arith.constant 0 : i32
    %c0_i32_0 = arith.constant 0 : i32
    %c0_i32_1 = arith.constant 0 : i32
    return %arg0, %c0_i32, %c0_i32_0 : i32, i32, i32
  }
  func.func @transform_1(%arg0: i32) -> (i32, i32) {
    %c0_i32 = arith.constant 0 : i32
    %c0_i32_0 = arith.constant 0 : i32
    return %arg0, %c0_i32 : i32, i32
  }
}

</mosaic_0001>

<llo_original>
// kernel: tpu_custom_call.1
$region0: #{tpu_custom_call.1}
  #allocation0 [shape = 'u32[]', space=smem, size = 0x4, offset = 0x4, fixed_abs, tag = 'smem constant byte address 0x4 - core index']
  #allocation1 [shape = 'u32[144,128]{1,0:T(1,128)}', space=vmem, size = 0x12000, scoped, tag = 'internal scratch']
  %s0 = inlined_call_operand.hbm [shape: f32[8,2,128], index: 0, kind: input, shape index: {}]
  %s1 = inlined_call_operand.hbm [shape: f32[8,16], index: 1, kind: output, shape index: {}]
  %s2 = sld [smem:[#allocation0]]
  $region18: #{tpu_custom_call.1} parent=0
    _
  %s4 = ssub.s32 1, %s2
  %s5 = scalar_select 0, %s4, %s2
  $region1: #{tpu_custom_call.1} parent=0
    #allocation2 [shape = 'u8[8192]{0}', space=vmem, size = 0x2000, scoped, tag = 'input window, operand 0, single buffered']
    #allocation3 [shape = 's32[1]{0}', space=sflag, size = 0x4, scoped, tag = 'scoped memory for tpu_custom_call.1']
    #allocation4 [shape = 's32[1]{0}', space=sflag, size = 0x4, scoped, tag = 'scoped memory for tpu_custom_call.1']
    #allocation5 [shape = 'u8[4096]{0}', space=vmem, size = 0x1000, scoped, tag = 'output window, operand 0, single buffered']
    %6 = vsyncpa [#allocation3], 0
    %7 = vsyncpa [#allocation4], 0
    // Predicated region
    $region2: #{tpu_custom_call.1} parent=1 // pred_check
      _
    $region3: #{tpu_custom_call.1} parent=1 // pred_check_branch
      %9 = sbr.rel (0) target = $region5
    $region4: #{tpu_custom_call.1} parent=1 // pred_region
      %s11 = ssub.s32 256, 256
      %12 = vsyncadd [#allocation3], %s11
      %s13 = sshll.u32 [#allocation2], 4
      %s14 = int_to_ptr.vmem [resolvable:$true] %s13
      %19 = dma.hbm_to_vmem [thread:$0]  %s0, 256, %s14, [#allocation3], 32, 32, 2
    $region5: #{tpu_custom_call.1} parent=1 // pred_fallthru
      _
    // Predicated region
    $region6: #{tpu_custom_call.1} parent=1 // pred_check
      _
    $region7: #{tpu_custom_call.1} parent=1 // pred_check_branch
      %21 = sbr.rel (0) target = $region9
    $region8: #{tpu_custom_call.1} parent=1 // pred_region
      %22 = dma.done [#allocation3], 256
    $region9: #{tpu_custom_call.1} parent=1 // pred_fallthru
      _
    %v23 = vld [vmem:[#allocation2] sm:$0x3]
    %v24 = vld [vmem:[#allocation2 + $0x2] sm:$0x3]
    %v25 = vld [vmem:[#allocation2 + $0x4] sm:$0x3]
    %v26 = vld [vmem:[#allocation2 + $0x6] sm:$0x3]
    %v27 = vld [vmem:[#allocation2 + $0x8] sm:$0x3]
    %v28 = vld [vmem:[#allocation2 + $0xa] sm:$0x3]
    %v29 = vld [vmem:[#allocation2 + $0xc] sm:$0x3]
    %v30 = vld [vmem:[#allocation2 + $0xe] sm:$0x3]
    %v31 = vmax.f32 %v23, 1e-06
    %v32 = vmax.f32 %v24, 1e-06
    %v33 = vmax.f32 %v25, 1e-06
    %v34 = vmax.f32 %v26, 1e-06
    %v35 = vmax.f32 %v27, 1e-06
    %v36 = vmax.f32 %v28, 1e-06
    %v37 = vmax.f32 %v29, 1e-06
    %v38 = vmax.f32 %v30, 1e-06
    %v39 = vmul.f32 %v31, %v31
    %v40 = vmul.f32 %v32, %v32
    %v41 = vmul.f32 %v33, %v33
    %v42 = vmul.f32 %v34, %v34
    %v43 = vmul.f32 %v35, %v35
    %v44 = vmul.f32 %v36, %v36
    %v45 = vmul.f32 %v37, %v37
    %v46 = vmul.f32 %v38, %v38
    %v47 = vmul.f32 %v39, %v31
    %v48 = vmul.f32 %v40, %v32
    %v49 = vmul.f32 %v41, %v33
    %v50 = vmul.f32 %v42, %v34
    %v51 = vmul.f32 %v43, %v35
    %v52 = vmul.f32 %v44, %v36
    %v53 = vmul.f32 %v45, %v37
    %v54 = vmul.f32 %v46, %v38
    %vm55 = vcmask 1041408
    %v56 = vsel %vm55, %v47, 0.0
    %v57 = vrot.slane %v56, 4
    %v58 = vadd.f32 %v56, %v57
    %v59 = vrot.slane %v58, 2
    %v60 = vadd.f32 %v58, %v59
    %v61 = vrot.slane %v60, 1
    %v62 = vadd.f32 %v60, %v61
    %v63 = vsel %vm55, %v48, 0.0
    %v64 = vrot.slane %v63, 4
    %v65 = vadd.f32 %v63, %v64
    %v66 = vrot.slane %v65, 2
    %v67 = vadd.f32 %v65, %v66
    %v68 = vrot.slane %v67, 1
    %v69 = vadd.f32 %v67, %v68
    %v70 = vsel %vm55, %v49, 0.0
    %v71 = vrot.slane %v70, 4
    %v72 = vadd.f32 %v70, %v71
    %v73 = vrot.slane %v72, 2
    %v74 = vadd.f32 %v72, %v73
    %v75 = vrot.slane %v74, 1
    %v76 = vadd.f32 %v74, %v75
    %v77 = vsel %vm55, %v50, 0.0
    %v78 = vrot.slane %v77, 4
    %v79 = vadd.f32 %v77, %v78
    %v80 = vrot.slane %v79, 2
    %v81 = vadd.f32 %v79, %v80
    %v82 = vrot.slane %v81, 1
    %v83 = vadd.f32 %v81, %v82
    %v84 = vsel %vm55, %v51, 0.0
    %v85 = vrot.slane %v84, 4
    %v86 = vadd.f32 %v84, %v85
    %v87 = vrot.slane %v86, 2
    %v88 = vadd.f32 %v86, %v87
    %v89 = vrot.slane %v88, 1
    %v90 = vadd.f32 %v88, %v89
    %v91 = vsel %vm55, %v52, 0.0
    %v92 = vrot.slane %v91, 4
    %v93 = vadd.f32 %v91, %v92
    %v94 = vrot.slane %v93, 2
    %v95 = vadd.f32 %v93, %v94
    %v96 = vrot.slane %v95, 1
    %v97 = vadd.f32 %v95, %v96
    %v98 = vsel %vm55, %v53, 0.0
    %v99 = vrot.slane %v98, 4
    %v100 = vadd.f32 %v98, %v99
    %v101 = vrot.slane %v100, 2
    %v102 = vadd.f32 %v100, %v101
    %v103 = vrot.slane %v102, 1
    %v104 = vadd.f32 %v102, %v103
    %v105 = vsel %vm55, %v54, 0.0
    %v106 = vrot.slane %v105, 4
    %v107 = vadd.f32 %v105, %v106
    %v108 = vrot.slane %v107, 2
    %v109 = vadd.f32 %v107, %v108
    %v110 = vrot.slane %v109, 1
    %v111 = vadd.f32 %v109, %v110
    %120 = vrot.lane.b32.xlu0 %v62, 112
    %v121 = vpop.permute.xlu0 %120
    %122 = vrot.lane.b32.xlu0 %v69, 112
    %v123 = vpop.permute.xlu0 %122
    %124 = vrot.lane.b32.xlu0 %v76, 112
    %v125 = vpop.permute.xlu0 %124
    %126 = vrot.lane.b32.xlu0 %v83, 112
    %v127 = vpop.permute.xlu0 %126
    %128 = vrot.lane.b32.xlu0 %v90, 112
    %v129 = vpop.permute.xlu0 %128
    %130 = vrot.lane.b32.xlu0 %v97, 112
    %v131 = vpop.permute.xlu0 %130
    %132 = vrot.lane.b32.xlu0 %v104, 112
    %v133 = vpop.permute.xlu0 %132
    %134 = vrot.lane.b32.xlu0 %v111, 112
    %v135 = vpop.permute.xlu0 %134
    %v144 = vadd.f32 %v62, %v121
    %v145 = vadd.f32 %v69, %v123
    %v146 = vadd.f32 %v76, %v125
    %v147 = vadd.f32 %v83, %v127
    %v148 = vadd.f32 %v90, %v129
    %v149 = vadd.f32 %v97, %v131
    %v150 = vadd.f32 %v104, %v133
    %v151 = vadd.f32 %v111, %v135
    %152 = vrot.lane.b32.xlu0 %v62, 96
    %v153 = vpop.permute.xlu0 %152
    %154 = vrot.lane.b32.xlu0 %v69, 96
    %v155 = vpop.permute.xlu0 %154
    %156 = vrot.lane.b32.xlu0 %v76, 96
    %v157 = vpop.permute.xlu0 %156
    %158 = vrot.lane.b32.xlu0 %v83, 96
    %v159 = vpop.permute.xlu0 %158
    %160 = vrot.lane.b32.xlu0 %v90, 96
    %v161 = vpop.permute.xlu0 %160
    %162 = vrot.lane.b32.xlu0 %v97, 96
    %v163 = vpop.permute.xlu0 %162
    %164 = vrot.lane.b32.xlu0 %v104, 96
    %v165 = vpop.permute.xlu0 %164
    %166 = vrot.lane.b32.xlu0 %v111, 96
    %v167 = vpop.permute.xlu0 %166
    %v176 = vadd.f32 %v144, %v153
    %v177 = vadd.f32 %v145, %v155
    %v178 = vadd.f32 %v146, %v157
    %v179 = vadd.f32 %v147, %v159
    %v180 = vadd.f32 %v148, %v161
    %v181 = vadd.f32 %v149, %v163
    %v182 = vadd.f32 %v150, %v165
    %v183 = vadd.f32 %v151, %v167
    %184 = vrot.lane.b32.xlu0 %v62, 80
    %v185 = vpop.permute.xlu0 %184
    %186 = vrot.lane.b32.xlu0 %v69, 80
    %v187 = vpop.permute.xlu0 %186
    %188 = vrot.lane.b32.xlu0 %v76, 80
    %v189 = vpop.permute.xlu0 %188
    %190 = vrot.lane.b32.xlu0 %v83, 80
    %v191 = vpop.permute.xlu0 %190
    %192 = vrot.lane.b32.xlu0 %v90, 80
    %v193 = vpop.permute.xlu0 %192
    %194 = vrot.lane.b32.xlu0 %v97, 80
    %v195 = vpop.permute.xlu0 %194
    %196 = vrot.lane.b32.xlu0 %v104, 80
    %v197 = vpop.permute.xlu0 %196
    %198 = vrot.lane.b32.xlu0 %v111, 80
    %v199 = vpop.permute.xlu0 %198
    %v208 = vadd.f32 %v176, %v185
    %v209 = vadd.f32 %v177, %v187
    %v210 = vadd.f32 %v178, %v189
    %v211 = vadd.f32 %v179, %v191
    %v212 = vadd.f32 %v180, %v193
    %v213 = vadd.f32 %v181, %v195
    %v214 = vadd.f32 %v182, %v197
    %v215 = vadd.f32 %v183, %v199
    %216 = vrot.lane.b32.xlu0 %v62, 64
    %v217 = vpop.permute.xlu0 %216
    %218 = vrot.lane.b32.xlu0 %v69, 64
    %v219 = vpop.permute.xlu0 %218
    %220 = vrot.lane.b32.xlu0 %v76, 64
    %v221 = vpop.permute.xlu0 %220
    %222 = vrot.lane.b32.xlu0 %v83, 64
    %v223 = vpop.permute.xlu0 %222
    %224 = vrot.lane.b32.xlu0 %v90, 64
    %v225 = vpop.permute.xlu0 %224
    %226 = vrot.lane.b32.xlu0 %v97, 64
    %v227 = vpop.permute.xlu0 %226
    %228 = vrot.lane.b32.xlu0 %v104, 64
    %v229 = vpop.permute.xlu0 %228
    %230 = vrot.lane.b32.xlu0 %v111, 64
    %v231 = vpop.permute.xlu0 %230
    %v240 = vadd.f32 %v208, %v217
    %v241 = vadd.f32 %v209, %v219
    %v242 = vadd.f32 %v210, %v221
    %v243 = vadd.f32 %v211, %v223
    %v244 = vadd.f32 %v212, %v225
    %v245 = vadd.f32 %v213, %v227
    %v246 = vadd.f32 %v214, %v229
    %v247 = vadd.f32 %v215, %v231
    %248 = vrot.lane.b32.xlu0 %v62, 48
    %v249 = vpop.permute.xlu0 %248
    %250 = vrot.lane.b32.xlu0 %v69, 48
    %v251 = vpop.permute.xlu0 %250
    %252 = vrot.lane.b32.xlu0 %v76, 48
    %v253 = vpop.permute.xlu0 %252
    %254 = vrot.lane.b32.xlu0 %v83, 48
    %v255 = vpop.permute.xlu0 %254
    %256 = vrot.lane.b32.xlu0 %v90, 48
    %v257 = vpop.permute.xlu0 %256
    %258 = vrot.lane.b32.xlu0 %v97, 48
    %v259 = vpop.permute.xlu0 %258
    %260 = vrot.lane.b32.xlu0 %v104, 48
    %v261 = vpop.permute.xlu0 %260
    %262 = vrot.lane.b32.xlu0 %v111, 48
    %v263 = vpop.permute.xlu0 %262
    %v272 = vadd.f32 %v240, %v249
    %v273 = vadd.f32 %v241, %v251
    %v274 = vadd.f32 %v242, %v253
    %v275 = vadd.f32 %v243, %v255
    %v276 = vadd.f32 %v244, %v257
    %v277 = vadd.f32 %v245, %v259
    %v278 = vadd.f32 %v246, %v261
    %v279 = vadd.f32 %v247, %v263
    %280 = vrot.lane.b32.xlu0 %v62, 32
    %v281 = vpop.permute.xlu0 %280
    %282 = vrot.lane.b32.xlu0 %v69, 32
    %v283 = vpop.permute.xlu0 %282
    %284 = vrot.lane.b32.xlu0 %v76, 32
    %v285 = vpop.permute.xlu0 %284
    %286 = vrot.lane.b32.xlu0 %v83, 32
    %v287 = vpop.permute.xlu0 %286
    %288 = vrot.lane.b32.xlu0 %v90, 32
    %v289 = vpop.permute.xlu0 %288
    %290 = vrot.lane.b32.xlu0 %v97, 32
    %v291 = vpop.permute.xlu0 %290
    %292 = vrot.lane.b32.xlu0 %v104, 32
    %v293 = vpop.permute.xlu0 %292
    %294 = vrot.lane.b32.xlu0 %v111, 32
    %v295 = vpop.permute.xlu0 %294
    %v304 = vadd.f32 %v272, %v281
    %v305 = vadd.f32 %v273, %v283
    %v306 = vadd.f32 %v274, %v285
    %v307 = vadd.f32 %v275, %v287
    %v308 = vadd.f32 %v276, %v289
    %v309 = vadd.f32 %v277, %v291
    %v310 = vadd.f32 %v278, %v293
    %v311 = vadd.f32 %v279, %v295
    %312 = vrot.lane.b32.xlu0 %v62, 16
    %v313 = vpop.permute.xlu0 %312
    %314 = vrot.lane.b32.xlu0 %v69, 16
    %v315 = vpop.permute.xlu0 %314
    %316 = vrot.lane.b32.xlu0 %v76, 16
    %v317 = vpop.permute.xlu0 %316
    %318 = vrot.lane.b32.xlu0 %v83, 16
    %v319 = vpop.permute.xlu0 %318
    %320 = vrot.lane.b32.xlu0 %v90, 16
    %v321 = vpop.permute.xlu0 %320
    %322 = vrot.lane.b32.xlu0 %v97, 16
    %v323 = vpop.permute.xlu0 %322
    %324 = vrot.lane.b32.xlu0 %v104, 16
    %v325 = vpop.permute.xlu0 %324
    %326 = vrot.lane.b32.xlu0 %v111, 16
    %v327 = vpop.permute.xlu0 %326
    %v336 = vadd.f32 %v304, %v313
    %v337 = vadd.f32 %v305, %v315
    %v338 = vadd.f32 %v306, %v317
    %v339 = vadd.f32 %v307, %v319
    %v340 = vadd.f32 %v308, %v321
    %v341 = vadd.f32 %v309, %v323
    %v342 = vadd.f32 %v310, %v325
    %v343 = vadd.f32 %v311, %v327
    %v344 = vmul.f32 %v336, 0.0625
    %v345 = vmul.f32 %v337, 0.0625
    %v346 = vmul.f32 %v338, 0.0625
    %v347 = vmul.f32 %v339, 0.0625
    %v348 = vmul.f32 %v340, 0.0625
    %v349 = vmul.f32 %v341, 0.0625
    %v350 = vmul.f32 %v342, 0.0625
    %v351 = vmul.f32 %v343, 0.0625
    %v352 = vlog2.pop %v344
    %v353 = vmul.f32 %v352, 0.6931472
    %v354 = vlog2.pop %v345
    %v355 = vmul.f32 %v354, 0.6931472
    %v356 = vlog2.pop %v346
    %v357 = vmul.f32 %v356, 0.6931472
    %v358 = vlog2.pop %v347
    %v359 = vmul.f32 %v358, 0.6931472
    %v360 = vlog2.pop %v348
    %v361 = vmul.f32 %v360, 0.6931472
    %v362 = vlog2.pop %v349
    %v363 = vmul.f32 %v362, 0.6931472
    %v364 = vlog2.pop %v350
    %v365 = vmul.f32 %v364, 0.6931472
    %v366 = vlog2.pop %v351
    %v367 = vmul.f32 %v366, 0.6931472
    %v368 = vmul.f32 %v353, 0.33333334
    %v369 = vmul.f32 %v355, 0.33333334
    %v370 = vmul.f32 %v357, 0.33333334
    %v371 = vmul.f32 %v359, 0.33333334
    %v372 = vmul.f32 %v361, 0.33333334
    %v373 = vmul.f32 %v363, 0.33333334
    %v374 = vmul.f32 %v365, 0.33333334
    %v375 = vmul.f32 %v367, 0.33333334
    %v376 = vmul.f32 %v368, 1.442695
    %v377 = vpow.pop %v376
    %v378 = vmul.f32 %v369, 1.442695
    %v379 = vpow.pop %v378
    %v380 = vmul.f32 %v370, 1.442695
    %v381 = vpow.pop %v380
    %v382 = vmul.f32 %v371, 1.442695
    %v383 = vpow.pop %v382
    %v384 = vmul.f32 %v372, 1.442695
    %v385 = vpow.pop %v384
    %v386 = vmul.f32 %v373, 1.442695
    %v387 = vpow.pop %v386
    %v388 = vmul.f32 %v374, 1.442695
    %v389 = vpow.pop %v388
    %v390 = vmul.f32 %v375, 1.442695
    %v391 = vpow.pop %v390
    %v400 = vrot.slane %v379, 7
    %vm401 = vcmask 1041409
    %v402 = vsel %vm401, %v400, %v377
    %v403 = vrot.slane %v381, 6
    %vm404 = vcmask 1042434
    %v405 = vsel %vm404, %v403, %v402
    %v406 = vrot.slane %v383, 5
    %vm407 = vcmask 1043459
    %v408 = vsel %vm407, %v406, %v405
    %v409 = vrot.slane %v385, 4
    %vm410 = vcmask 1044484
    %v411 = vsel %vm410, %v409, %v408
    %v412 = vrot.slane %v387, 3
    %vm413 = vcmask 1045509
    %v414 = vsel %vm413, %v412, %v411
    %v415 = vrot.slane %v389, 2
    %vm416 = vcmask 1046534
    %v417 = vsel %vm416, %v415, %v414
    %v418 = vrot.slane %v391, 1
    %vm419 = vcmask 1047559
    %v420 = vsel %vm419, %v418, %v417
    %vm422 = vcmask 130048
    %423 = vst.msk [vmem:[#allocation5] sm:$0xff] %vm422, %v420
    // Predicated region
    $region10: #{tpu_custom_call.1} parent=1 // pred_check
      _
    $region11: #{tpu_custom_call.1} parent=1 // pred_check_branch
      %425 = sbr.rel (0) target = $region13
    $region12: #{tpu_custom_call.1} parent=1 // pred_region
      %s427 = ssub.s32 128, 128
      %428 = vsyncadd [#allocation4], %s427
      %s430 = sshll.u32 [#allocation5], 4
      %s431 = int_to_ptr.vmem [resolvable:$true] %s430
      %433 = dma.vmem_to_hbm [thread:$0]  %s431, 128, %s1, [#allocation4]
    $region13: #{tpu_custom_call.1} parent=1 // pred_fallthru
      _
    // Predicated region
    $region14: #{tpu_custom_call.1} parent=1 // pred_check
      _
    $region15: #{tpu_custom_call.1} parent=1 // pred_check_branch
      %435 = sbr.rel (0) target = $region17
    $region16: #{tpu_custom_call.1} parent=1 // pred_region
      %436 = dma.done [#allocation4], 128
    $region17: #{tpu_custom_call.1} parent=1 // pred_fallthru
      _
    %437 = vsyncpa [#allocation3], 1
    %438 = vsyncpa [#allocation4], 1

</llo_original>
